<compile_context>
chip_gen: v5e
topology: v5e:2x2
jax: 0.10.0
libtpu: 0.0.40
codegen_flags: <defaults>
</compile_context>

<pallas_src>
import numpy as np
import jax
import jax.numpy as jnp
from jax.experimental import pallas as pl
from jax.experimental.pallas import tpu as pltpu


def _round_up(x, m):
    return (x + m - 1) // m * m


def _band_selector(per_c, w_sp, stride):
    """band[s, wo, kx] = 1 iff s == stride*(wo+kx-1) and 0 <= wo+kx-1 < w_sp.

    Encodes the horizontal (kx) conv taps, the horizontal zero padding (columns
    outside the image simply have no entry) and the lane stride of pooled
    inputs (valid data only on even lane slots)."""
    band = np.zeros((per_c, w_sp, 3), np.float32)
    for wo in range(w_sp):
        for kx in range(3):
            p = wo + kx - 1
            if 0 <= p < w_sp:
                band[stride * p, wo, kx] = 1.0
    return band


def _stacked_conv_weight(wk_hwio, per_c, w_sp, stride, pad_rows_to=None):
    """HWIO (3,3,ci,co) kernel -> banded (3*rows_per_ky, co*w_sp) bf16 matrix.

    Row index = ky*rows_per_ky + ci*per_c + stride*p (p = input column),
    column index = co*w_sp + wo.  With this matrix the whole 3x3 conv is a
    single matmul against the ky-stacked, (c, x)-packed row source."""
    c_in, c_out = wk_hwio.shape[2], wk_hwio.shape[3]
    band = jnp.asarray(_band_selector(per_c, w_sp, stride))
    wgt = jnp.einsum("swk,ykio->yisow", band, wk_hwio).reshape(
        3, c_in * per_c, c_out * w_sp)
    if pad_rows_to is not None and pad_rows_to > c_in * per_c:
        wgt = jnp.pad(wgt, ((0, 0), (0, pad_rows_to - c_in * per_c), (0, 0)))
    return wgt.reshape(-1, c_out * w_sp).astype(jnp.bfloat16)


def _make_kernel(h, w):
    c1, c2 = 8, 16
    h2, w2 = h // 2, w // 2
    h3 = h // 4
    L1 = c1 * w        # conv8  output lanes, lane = c*w  + x
    L2 = c2 * w2       # conv16 output lanes, lane = c*w2 + x

    def lane_shift_left(x):
        # out[:, l] = x[:, l+1]; the wrapped last lane only lands on junk lanes.
        return jnp.concatenate([x[:, 1:], x[:, :1]], axis=1)

    def kernel(p1_ref, w1_ref, b1_ref, w2_ref, b2_ref, w3_ref, b3_ref,
               wl_ref, bc_ref, o_ref, y1_ref, y2_ref, p2_ref, p3_ref):
        bf16 = jnp.bfloat16
        f32 = jnp.float32

        # ---- Block8: conv(3->8) + ReLU, one bf16 MXU matmul ----------------
        s1 = jnp.concatenate(
            [p1_ref[0, 0:h, :], p1_ref[0, 1:h + 1, :], p1_ref[0, 2:h + 2, :]],
            axis=-1)
        y1_ref[...] = jnp.maximum(
            jnp.dot(s1.astype(bf16), w1_ref[...],
                    preferred_element_type=f32) + b1_ref[...], 0.0)

        # ---- 2x2 max-pool: strided row-pair max + lane-shift column max ----
        r1 = jnp.maximum(y1_ref[pl.ds(0, h2, stride=2), :],
                         y1_ref[pl.ds(1, h2, stride=2), :])
        m1 = jnp.maximum(r1, lane_shift_left(r1))   # valid on even lane slots
        zrow1 = jnp.zeros((1, L1), f32)
        p2_ref[...] = jnp.concatenate([zrow1, m1, zrow1], axis=0)

        # ---- Block16: conv(8->16) + ReLU ------------------------------------
        s2 = jnp.concatenate(
            [p2_ref[0:h2, :], p2_ref[1:h2 + 1, :], p2_ref[2:h2 + 2, :]],
            axis=-1)
        y2_ref[...] = jnp.maximum(
            jnp.dot(s2.astype(bf16), w2_ref[...],
                    preferred_element_type=f32) + b2_ref[...], 0.0)

        r2 = jnp.maximum(y2_ref[pl.ds(0, h3, stride=2), :],
                         y2_ref[pl.ds(1, h3, stride=2), :])
        m2 = jnp.maximum(r2, lane_shift_left(r2))
        zrow2 = jnp.zeros((1, L2), f32)
        p3_ref[...] = jnp.concatenate([zrow2, m2, zrow2], axis=0)

        # ---- Block32: conv(16->32) + ReLU (no pooling) ----------------------
        s3 = jnp.concatenate(
            [p3_ref[0:h3, :], p3_ref[1:h3 + 1, :], p3_ref[2:h3 + 2, :]],
            axis=-1)
        y3 = jnp.maximum(
            jnp.dot(s3.astype(bf16), w3_ref[...],
                    preferred_element_type=f32) + b3_ref[...], 0.0)

        # ---- CatBlock: cat([a, a]) @ Wcat + b == a @ (Wcat[:f]+Wcat[f:]) + b
        # TODO(synk): Dropout uses eval-mode (identity) semantics.
        out = jnp.sum(y3 * wl_ref[...], keepdims=True) + bc_ref[...]
        o_ref[...] = jnp.reshape(out, (1, 1, 1))

    scratch = [
        pltpu.VMEM((h, L1), jnp.float32),          # y1: conv8 output
        pltpu.VMEM((h2, L2), jnp.float32),         # y2: conv16 output
        pltpu.VMEM((h2 + 2, L1), jnp.float32),     # p2: pooled-8 (+pad rows)
        pltpu.VMEM((h3 + 2, L2), jnp.float32),     # p3: pooled-16 (+pad rows)
    ]
    return kernel, scratch


@jax.jit
def architecture_forward(x_nchw, params):
    c0, c1, c2, c3 = 3, 8, 16, 32
    n, cin, h, w = x_nchw.shape
    assert cin == c0 and h % 4 == 0 and w % 4 == 0, "need C=3 and H, W % 4 == 0"
    h3, w3 = h // 4, w // 4
    feat = c3 * h3 * w3

    kernel, scratch = _make_kernel(h, w)

    # Input: NCHW -> per-image rows with a (c, x)-packed, zero-padded lane dim.
    L0p = _round_up(c0 * w, 128)
    xr = jnp.transpose(x_nchw, (0, 2, 1, 3)).reshape(n, h, c0 * w)
    p1 = jnp.pad(xr.astype(jnp.float32),
                 ((0, 0), (1, 1), (0, L0p - c0 * w)))        # (n, h+2, L0p)

    # Banded, ky-stacked conv weights (bf16 MXU operands) + lane-tiled biases.
    w1s = _stacked_conv_weight(params["w8"], w, w, 1, pad_rows_to=L0p)
    w2s = _stacked_conv_weight(params["w16"], w, w // 2, 2)
    w3s = _stacked_conv_weight(params["w32"], w // 2, w3, 2)
    b1r = jnp.repeat(params["b8"], w).reshape(1, c1 * w)
    b2r = jnp.repeat(params["b16"], w // 2).reshape(1, c2 * (w // 2))
    b3r = jnp.repeat(params["b32"], w3).reshape(1, c3 * w3)

    # Fold the duplicated branch into the final linear weights; match the
    # PyTorch NCHW flatten order and the kernel's (c, x) lane packing.
    w_cat = params["w_cat"]
    w_eff = (w_cat[:feat, 0] + w_cat[feat:, 0]).reshape(c3, h3, w3)
    wl = jnp.transpose(w_eff, (1, 0, 2)).reshape(h3, c3 * w3)
    bc = params["b_cat"].reshape(1, 1)

    def _full(arr):
        nd = arr.ndim
        return pl.BlockSpec(arr.shape, lambda b, _nd=nd: (0,) * _nd)

    out = pl.pallas_call(
        kernel,
        out_shape=jax.ShapeDtypeStruct((n, 1, 1), jnp.float32),
        grid=(n,),
        in_specs=[
            pl.BlockSpec((1, h + 2, L0p), lambda b: (b, 0, 0)),
            _full(w1s), _full(b1r), _full(w2s), _full(b2r),
            _full(w3s), _full(b3r), _full(wl), _full(bc),
        ],
        out_specs=pl.BlockSpec((1, 1, 1), lambda b: (b, 0, 0)),
        scratch_shapes=scratch,
        compiler_params=pltpu.CompilerParams(
            dimension_semantics=("parallel",)),
    )(p1, w1s, b1r, w2s, b2r, w3s, b3r, wl, bc)
    return out.reshape(n, 1)


# ---------------------------------------------------------------------------
# Deterministic parameter init + pure-JAX reference for verification
# ---------------------------------------------------------------------------
def init_params(key, h, w):
    ks = jax.random.split(key, 8)

    def conv_w(k, cin, cout):
        fan_in = 9 * cin
        return (jax.random.normal(k, (3, 3, cin, cout), jnp.float32)
                / jnp.sqrt(float(fan_in)))

    feat = 32 * (h // 4) * (w // 4)
    cat_in = 2 * feat
    return {
        "w8": conv_w(ks[0], 3, 8),
        "b8": 0.01 * jax.random.normal(ks[1], (8,), jnp.float32),
        "w16": conv_w(ks[2], 8, 16),
        "b16": 0.01 * jax.random.normal(ks[3], (16,), jnp.float32),
        "w32": conv_w(ks[4], 16, 32),
        "b32": 0.01 * jax.random.normal(ks[5], (32,), jnp.float32),
        "w_cat": (jax.random.normal(ks[6], (cat_in, 1), jnp.float32)
                  / jnp.sqrt(float(cat_in))),
        "b_cat": 0.01 * jax.random.normal(ks[7], (1,), jnp.float32),
    }


def reference_forward(x_nchw, params):
    x = jnp.transpose(x_nchw, (0, 2, 3, 1))

    def conv(xin, wk, b):
        y = jax.lax.conv_general_dilated(
            xin, wk, (1, 1), "SAME",
            dimension_numbers=("NHWC", "HWIO", "NHWC"))
        return jnp.maximum(y + b, 0.0)

    def pool(y):
        return jax.lax.reduce_window(y, -jnp.inf, jax.lax.max,
                                     (1, 2, 2, 1), (1, 2, 2, 1), "VALID")

    def feats(xin):
        a = pool(conv(xin, params["w8"], params["b8"]))
        a = pool(conv(a, params["w16"], params["b16"]))
        a = conv(a, params["w32"], params["b32"])
        a = jnp.transpose(a, (0, 3, 1, 2))          # PyTorch (C,H,W) flatten
        return a.reshape(a.shape[0], -1)

    a = feats(x)
    b = feats(x)                                    # shared modules -> b == a
    cat = jnp.concatenate([a, b], axis=1)
    return jnp.dot(cat, params["w_cat"]) + params["b_cat"].reshape(1, -1)


if __name__ == "__main__":
    key = jax.random.PRNGKey(0)
    N, C, H, W = 2, 3, 16, 16          # small 16x16 RGB inputs
    kx, kp = jax.random.split(key)
    x = jax.random.normal(kx, (N, C, H, W), jnp.float32)
    params = init_params(kp, H, W)

    out = jax.block_until_ready(architecture_forward(x, params))
    ref = jax.block_until_ready(reference_forward(x, params))

    assert out.shape == (N, 1), out.shape
    # bf16 MXU operands in the kernel -> slightly relaxed comparison tolerance.
    if not jnp.allclose(out, ref, rtol=2e-2, atol=2e-2):
        raise AssertionError(f"mismatch: pallas={out} reference={ref}")
    print("KERNEL_OK")
</pallas_src>

<mosaic_0001>
module attributes {stable_mosaic.version = 11 : i64} {
  func.func @kernel(%arg0: i32, %arg1: memref<1x18x128xf32, #tpu.memory_space<vmem>>, %arg2: memref<384x128xbf16, #tpu.memory_space<vmem>>, %arg3: memref<1x128xf32, #tpu.memory_space<vmem>>, %arg4: memref<384x128xbf16, #tpu.memory_space<vmem>>, %arg5: memref<1x128xf32, #tpu.memory_space<vmem>>, %arg6: memref<384x128xbf16, #tpu.memory_space<vmem>>, %arg7: memref<1x128xf32, #tpu.memory_space<vmem>>, %arg8: memref<4x128xf32, #tpu.memory_space<vmem>>, %arg9: memref<1x1xf32, #tpu.memory_space<vmem>>, %arg10: memref<1x1x1xf32, #tpu.memory_space<vmem>>, %arg11: memref<16x128xf32, #tpu.memory_space<vmem>>, %arg12: memref<8x128xf32, #tpu.memory_space<vmem>>, %arg13: memref<10x128xf32, #tpu.memory_space<vmem>>, %arg14: memref<6x128xf32, #tpu.memory_space<vmem>>) attributes {dimension_semantics = [#tpu.dimension_semantics<parallel>], iteration_bounds = array<i64: 2>, scalar_prefetch = 0 : i64, scratch_operands = 4 : i64, tpu.core_type = #tpu.core_type<tc>, window_params = [{transform_indices = @transform_0, window_bounds = array<i64: 1, 18, 128>}, {pipeline_mode = #tpu.pipeline_mode<synchronous>, transform_indices = @transform_1, window_bounds = array<i64: 384, 128>}, {pipeline_mode = #tpu.pipeline_mode<synchronous>, transform_indices = @transform_2, window_bounds = array<i64: 1, 128>}, {pipeline_mode = #tpu.pipeline_mode<synchronous>, transform_indices = @transform_3, window_bounds = array<i64: 384, 128>}, {pipeline_mode = #tpu.pipeline_mode<synchronous>, transform_indices = @transform_4, window_bounds = array<i64: 1, 128>}, {pipeline_mode = #tpu.pipeline_mode<synchronous>, transform_indices = @transform_5, window_bounds = array<i64: 384, 128>}, {pipeline_mode = #tpu.pipeline_mode<synchronous>, transform_indices = @transform_6, window_bounds = array<i64: 1, 128>}, {pipeline_mode = #tpu.pipeline_mode<synchronous>, transform_indices = @transform_7, window_bounds = array<i64: 4, 128>}, {pipeline_mode = #tpu.pipeline_mode<synchronous>, transform_indices = @transform_8, window_bounds = array<i64: 1, 1>}, {transform_indices = @transform_9, window_bounds = array<i64: 1, 1, 1>}]} {
    %c0 = arith.constant 0 : index
    %c0_0 = arith.constant 0 : index
    %c0_1 = arith.constant 0 : index
    %0 = vector.load %arg1[%c0, %c0_0, %c0_1] : memref<1x18x128xf32, #tpu.memory_space<vmem>>, vector<1x16x128xf32>
    %1 = vector.shape_cast %0 : vector<1x16x128xf32> to vector<16x128xf32>
    %c0_2 = arith.constant 0 : index
    %c1 = arith.constant 1 : index
    %c0_3 = arith.constant 0 : index
    %2 = vector.load %arg1[%c0_2, %c1, %c0_3] : memref<1x18x128xf32, #tpu.memory_space<vmem>>, vector<1x16x128xf32>
    %3 = vector.shape_cast %2 : vector<1x16x128xf32> to vector<16x128xf32>
    %c0_4 = arith.constant 0 : index
    %c2 = arith.constant 2 : index
    %c0_5 = arith.constant 0 : index
    %4 = vector.load %arg1[%c0_4, %c2, %c0_5] : memref<1x18x128xf32, #tpu.memory_space<vmem>>, vector<1x16x128xf32>
    %5 = vector.shape_cast %4 : vector<1x16x128xf32> to vector<16x128xf32>
    %6 = tpu.concatenate %1, %3, %5 in 1 : vector<16x128xf32>, vector<16x128xf32>, vector<16x128xf32> -> vector<16x384xf32>
    %7 = arith.truncf %6 : vector<16x384xf32> to vector<16x384xbf16>
    %c0_6 = arith.constant 0 : index
    %c0_7 = arith.constant 0 : index
    %8 = vector.load %arg2[%c0_6, %c0_7] : memref<384x128xbf16, #tpu.memory_space<vmem>>, vector<384x128xbf16>
    %cst = arith.constant dense<0.000000e+00> : vector<16x128xf32>
    %9 = tpu.matmul %7, %8, %cst {dimension_numbers = #tpu.dot_dimension_numbers<[1], [0], [0], [1], [0, 0, 1, 1], [], []>} : vector<16x384xbf16>, vector<384x128xbf16>, vector<16x128xf32> -> vector<16x128xf32>
    %c0_8 = arith.constant 0 : index
    %c0_9 = arith.constant 0 : index
    %10 = vector.load %arg3[%c0_8, %c0_9] : memref<1x128xf32, #tpu.memory_space<vmem>>, vector<1x128xf32>
    %11 = vector.broadcast %10 : vector<1x128xf32> to vector<16x128xf32>
    %12 = arith.addf %9, %11 : vector<16x128xf32>
    %cst_10 = arith.constant 0.000000e+00 : f32
    %13 = vector.broadcast %cst_10 : f32 to vector<16x128xf32>
    %14 = arith.maximumf %12, %13 : vector<16x128xf32>
    %c0_11 = arith.constant 0 : index
    %c0_12 = arith.constant 0 : index
    %15 = vector.load %arg11[%c0_11, %c0_12] : memref<16x128xf32, #tpu.memory_space<vmem>>, vector<16x128xf32>
    tpu.vector_store %arg11[%c0_11, %c0_12], %14 {strides = array<i32>} : memref<16x128xf32, #tpu.memory_space<vmem>>, vector<16x128xf32>,
    %c0_13 = arith.constant 0 : index
    %c0_14 = arith.constant 0 : index
    %16 = tpu.strided_load %arg11[%c0_13, %c0_14] {strides = array<i32: 2, 1>} : memref<16x128xf32, #tpu.memory_space<vmem>>, vector<8x128xf32>
    %c1_15 = arith.constant 1 : index
    %c0_16 = arith.constant 0 : index
    %17 = tpu.strided_load %arg11[%c1_15, %c0_16] {strides = array<i32: 2, 1>} : memref<16x128xf32, #tpu.memory_space<vmem>>, vector<8x128xf32>
    %18 = arith.maximumf %16, %17 : vector<8x128xf32>
    %19 = vector.extract_strided_slice %18 {offsets = [0, 1], sizes = [8, 127], strides = [1, 1]} : vector<8x128xf32> to vector<8x127xf32>
    %20 = vector.extract_strided_slice %18 {offsets = [0, 0], sizes = [8, 1], strides = [1, 1]} : vector<8x128xf32> to vector<8x1xf32>
    %21 = tpu.concatenate %19, %20 in 1 : vector<8x127xf32>, vector<8x1xf32> -> vector<8x128xf32>
    %22 = arith.maximumf %18, %21 : vector<8x128xf32>
    %cst_17 = arith.constant 0.000000e+00 : f32
    %23 = vector.broadcast %cst_17 : f32 to vector<1x128xf32>
    %24 = tpu.concatenate %23, %22, %23 in 0 : vector<1x128xf32>, vector<8x128xf32>, vector<1x128xf32> -> vector<10x128xf32>
    %c0_18 = arith.constant 0 : index
    %c0_19 = arith.constant 0 : index
    %25 = vector.load %arg13[%c0_18, %c0_19] : memref<10x128xf32, #tpu.memory_space<vmem>>, vector<10x128xf32>
    tpu.vector_store %arg13[%c0_18, %c0_19], %24 {strides = array<i32>} : memref<10x128xf32, #tpu.memory_space<vmem>>, vector<10x128xf32>,
    %c0_20 = arith.constant 0 : index
    %c0_21 = arith.constant 0 : index
    %26 = vector.load %arg13[%c0_20, %c0_21] : memref<10x128xf32, #tpu.memory_space<vmem>>, vector<8x128xf32>
    %c1_22 = arith.constant 1 : index
    %c0_23 = arith.constant 0 : index
    %27 = vector.load %arg13[%c1_22, %c0_23] : memref<10x128xf32, #tpu.memory_space<vmem>>, vector<8x128xf32>
    %c2_24 = arith.constant 2 : index
    %c0_25 = arith.constant 0 : index
    %28 = vector.load %arg13[%c2_24, %c0_25] : memref<10x128xf32, #tpu.memory_space<vmem>>, vector<8x128xf32>
    %29 = tpu.concatenate %26, %27, %28 in 1 : vector<8x128xf32>, vector<8x128xf32>, vector<8x128xf32> -> vector<8x384xf32>
    %30 = arith.truncf %29 : vector<8x384xf32> to vector<8x384xbf16>
    %c0_26 = arith.constant 0 : index
    %c0_27 = arith.constant 0 : index
    %31 = vector.load %arg4[%c0_26, %c0_27] : memref<384x128xbf16, #tpu.memory_space<vmem>>, vector<384x128xbf16>
    %cst_28 = arith.constant dense<0.000000e+00> : vector<8x128xf32>
    %32 = tpu.matmul %30, %31, %cst_28 {dimension_numbers = #tpu.dot_dimension_numbers<[1], [0], [0], [1], [0, 0, 1, 1], [], []>} : vector<8x384xbf16>, vector<384x128xbf16>, vector<8x128xf32> -> vector<8x128xf32>
    %c0_29 = arith.constant 0 : index
    %c0_30 = arith.constant 0 : index
    %33 = vector.load %arg5[%c0_29, %c0_30] : memref<1x128xf32, #tpu.memory_space<vmem>>, vector<1x128xf32>
    %34 = vector.broadcast %33 : vector<1x128xf32> to vector<8x128xf32>
    %35 = arith.addf %32, %34 : vector<8x128xf32>
    %cst_31 = arith.constant 0.000000e+00 : f32
    %36 = vector.broadcast %cst_31 : f32 to vector<8x128xf32>
    %37 = arith.maximumf %35, %36 : vector<8x128xf32>
    %c0_32 = arith.constant 0 : index
    %c0_33 = arith.constant 0 : index
    %38 = vector.load %arg12[%c0_32, %c0_33] : memref<8x128xf32, #tpu.memory_space<vmem>>, vector<8x128xf32>
    tpu.vector_store %arg12[%c0_32, %c0_33], %37 {strides = array<i32>} : memref<8x128xf32, #tpu.memory_space<vmem>>, vector<8x128xf32>,
    %c0_34 = arith.constant 0 : index
    %c0_35 = arith.constant 0 : index
    %39 = tpu.strided_load %arg12[%c0_34, %c0_35] {strides = array<i32: 2, 1>} : memref<8x128xf32, #tpu.memory_space<vmem>>, vector<4x128xf32>
    %c1_36 = arith.constant 1 : index
    %c0_37 = arith.constant 0 : index
    %40 = tpu.strided_load %arg12[%c1_36, %c0_37] {strides = array<i32: 2, 1>} : memref<8x128xf32, #tpu.memory_space<vmem>>, vector<4x128xf32>
    %41 = arith.maximumf %39, %40 : vector<4x128xf32>
    %42 = vector.extract_strided_slice %41 {offsets = [0, 1], sizes = [4, 127], strides = [1, 1]} : vector<4x128xf32> to vector<4x127xf32>
    %43 = vector.extract_strided_slice %41 {offsets = [0, 0], sizes = [4, 1], strides = [1, 1]} : vector<4x128xf32> to vector<4x1xf32>
    %44 = tpu.concatenate %42, %43 in 1 : vector<4x127xf32>, vector<4x1xf32> -> vector<4x128xf32>
    %45 = arith.maximumf %41, %44 : vector<4x128xf32>
    %cst_38 = arith.constant 0.000000e+00 : f32
    %46 = vector.broadcast %cst_38 : f32 to vector<1x128xf32>
    %47 = tpu.concatenate %46, %45, %46 in 0 : vector<1x128xf32>, vector<4x128xf32>, vector<1x128xf32> -> vector<6x128xf32>
    %c0_39 = arith.constant 0 : index
    %c0_40 = arith.constant 0 : index
    %48 = vector.load %arg14[%c0_39, %c0_40] : memref<6x128xf32, #tpu.memory_space<vmem>>, vector<6x128xf32>
    tpu.vector_store %arg14[%c0_39, %c0_40], %47 {strides = array<i32>} : memref<6x128xf32, #tpu.memory_space<vmem>>, vector<6x128xf32>,
    %c0_41 = arith.constant 0 : index
    %c0_42 = arith.constant 0 : index
    %49 = vector.load %arg14[%c0_41, %c0_42] : memref<6x128xf32, #tpu.memory_space<vmem>>, vector<4x128xf32>
    %c1_43 = arith.constant 1 : index
    %c0_44 = arith.constant 0 : index
    %50 = vector.load %arg14[%c1_43, %c0_44] : memref<6x128xf32, #tpu.memory_space<vmem>>, vector<4x128xf32>
    %c2_45 = arith.constant 2 : index
    %c0_46 = arith.constant 0 : index
    %51 = vector.load %arg14[%c2_45, %c0_46] : memref<6x128xf32, #tpu.memory_space<vmem>>, vector<4x128xf32>
    %52 = tpu.concatenate %49, %50, %51 in 1 : vector<4x128xf32>, vector<4x128xf32>, vector<4x128xf32> -> vector<4x384xf32>
    %53 = arith.truncf %52 : vector<4x384xf32> to vector<4x384xbf16>
    %c0_47 = arith.constant 0 : index
    %c0_48 = arith.constant 0 : index
    %54 = vector.load %arg6[%c0_47, %c0_48] : memref<384x128xbf16, #tpu.memory_space<vmem>>, vector<384x128xbf16>
    %cst_49 = arith.constant dense<0.000000e+00> : vector<4x128xf32>
    %55 = tpu.matmul %53, %54, %cst_49 {dimension_numbers = #tpu.dot_dimension_numbers<[1], [0], [0], [1], [0, 0, 1, 1], [], []>} : vector<4x384xbf16>, vector<384x128xbf16>, vector<4x128xf32> -> vector<4x128xf32>
    %c0_50 = arith.constant 0 : index
    %c0_51 = arith.constant 0 : index
    %56 = vector.load %arg7[%c0_50, %c0_51] : memref<1x128xf32, #tpu.memory_space<vmem>>, vector<1x128xf32>
    %57 = vector.broadcast %56 : vector<1x128xf32> to vector<4x128xf32>
    %58 = arith.addf %55, %57 : vector<4x128xf32>
    %cst_52 = arith.constant 0.000000e+00 : f32
    %59 = vector.broadcast %cst_52 : f32 to vector<4x128xf32>
    %60 = arith.maximumf %58, %59 : vector<4x128xf32>
    %c0_53 = arith.constant 0 : index
    %c0_54 = arith.constant 0 : index
    %61 = vector.load %arg8[%c0_53, %c0_54] : memref<4x128xf32, #tpu.memory_space<vmem>>, vector<4x128xf32>
    %62 = arith.mulf %60, %61 : vector<4x128xf32>
    %63 = vector.shape_cast %62 : vector<4x128xf32> to vector<1x4x128xf32>
    %cst_55 = arith.constant dense<0.000000e+00> : vector<1xf32>
    %64 = vector.multi_reduction <add>, %63, %cst_55 [1, 2] : vector<1x4x128xf32> to vector<1xf32>
    %65 = vector.shape_cast %64 : vector<1xf32> to vector<1x1x1xf32>
    %66 = vector.extract %65[0, 0, 0] : f32 from vector<1x1x1xf32>
    %67 = vector.broadcast %66 : f32 to vector<1x1xf32>
    %c0_56 = arith.constant 0 : index
    %c0_57 = arith.constant 0 : index
    %68 = vector.load %arg9[%c0_56, %c0_57] : memref<1x1xf32, #tpu.memory_space<vmem>>, vector<1x1xf32>
    %69 = arith.addf %67, %68 : vector<1x1xf32>
    %70 = vector.shape_cast %69 : vector<1x1xf32> to vector<1x1x1xf32>
    %c0_58 = arith.constant 0 : index
    %c0_59 = arith.constant 0 : index
    %c0_60 = arith.constant 0 : index
    %71 = vector.load %arg10[%c0_58, %c0_59, %c0_60] : memref<1x1x1xf32, #tpu.memory_space<vmem>>, vector<1x1x1xf32>
    tpu.vector_store %arg10[%c0_58, %c0_59, %c0_60], %70 {strides = array<i32>} : memref<1x1x1xf32, #tpu.memory_space<vmem>>, vector<1x1x1xf32>,
    return
  }
  func.func @transform_0(%arg0: i32) -> (i32, i32, i32) {
    %c0_i32 = arith.constant 0 : i32
    %c0_i32_0 = arith.constant 0 : i32
    %c0_i32_1 = arith.constant 0 : i32
    return %arg0, %c0_i32, %c0_i32_0 : i32, i32, i32
  }
  func.func @transform_1(%arg0: i32) -> (i32, i32) {
    %c0_i32 = arith.constant 0 : i32
    %c0_i32_0 = arith.constant 0 : i32
    %c0_i32_1 = arith.constant 0 : i32
    return %c0_i32, %c0_i32_0 : i32, i32
  }
  func.func @transform_2(%arg0: i32) -> (i32, i32) {
    %c0_i32 = arith.constant 0 : i32
    %c0_i32_0 = arith.constant 0 : i32
    %c0_i32_1 = arith.constant 0 : i32
    return %c0_i32, %c0_i32_0 : i32, i32
  }
  func.func @transform_3(%arg0: i32) -> (i32, i32) {
    %c0_i32 = arith.constant 0 : i32
    %c0_i32_0 = arith.constant 0 : i32
    %c0_i32_1 = arith.constant 0 : i32
    return %c0_i32, %c0_i32_0 : i32, i32
  }
  func.func @transform_4(%arg0: i32) -> (i32, i32) {
    %c0_i32 = arith.constant 0 : i32
    %c0_i32_0 = arith.constant 0 : i32
    %c0_i32_1 = arith.constant 0 : i32
    return %c0_i32, %c0_i32_0 : i32, i32
  }
  func.func @transform_5(%arg0: i32) -> (i32, i32) {
    %c0_i32 = arith.constant 0 : i32
    %c0_i32_0 = arith.constant 0 : i32
    %c0_i32_1 = arith.constant 0 : i32
    return %c0_i32, %c0_i32_0 : i32, i32
  }
  func.func @transform_6(%arg0: i32) -> (i32, i32) {
    %c0_i32 = arith.constant 0 : i32
    %c0_i32_0 = arith.constant 0 : i32
    %c0_i32_1 = arith.constant 0 : i32
    return %c0_i32, %c0_i32_0 : i32, i32
  }
  func.func @transform_7(%arg0: i32) -> (i32, i32) {
    %c0_i32 = arith.constant 0 : i32
    %c0_i32_0 = arith.constant 0 : i32
    %c0_i32_1 = arith.constant 0 : i32
    return %c0_i32, %c0_i32_0 : i32, i32
  }
  func.func @transform_8(%arg0: i32) -> (i32, i32) {
    %c0_i32 = arith.constant 0 : i32
    %c0_i32_0 = arith.constant 0 : i32
    %c0_i32_1 = arith.constant 0 : i32
    return %c0_i32, %c0_i32_0 : i32, i32
  }
  func.func @transform_9(%arg0: i32) -> (i32, i32, i32) {
    %c0_i32 = arith.constant 0 : i32
    %c0_i32_0 = arith.constant 0 : i32
    %c0_i32_1 = arith.constant 0 : i32
    return %arg0, %c0_i32, %c0_i32_0 : i32, i32, i32
  }
}

</mosaic_0001>

<llo_original>
// kernel: architecture_forward.1
$region0: #{architecture_forward.1}
  #allocation0 [shape = 'u32[]', space=smem, size = 0x4, offset = 0x4, fixed_abs, tag = 'smem constant byte address 0x4 - core index']
  #allocation1 [shape = 'u32[72,128]{1,0:T(1,128)}', space=vmem, size = 0x9000, scoped, tag = 'internal scratch']
  #allocation2 [shape = 'f32[16,128]{1,0:T(8,128)}', space=vmem, size = 0x2000, scoped, tag = 'scratch operand']
  #allocation3 [shape = 'f32[8,128]{1,0:T(8,128)}', space=vmem, size = 0x1000, scoped, tag = 'scratch operand']
  #allocation4 [shape = 'f32[10,128]{1,0:T(8,128)}', space=vmem, size = 0x2000, scoped, tag = 'scratch operand']
  #allocation5 [shape = 'f32[6,128]{1,0:T(8,128)}', space=vmem, size = 0x1000, scoped, tag = 'scratch operand']
  #allocation6 [shape = 'f32[1,1]{1,0:T(1,128)S(1)}', space=vmem, size = 0x200, scoped, tag = 'scoped memory for architecture_forward.1']
  %s0 = inlined_call_operand.vmem [shape: f32[2,18,128], index: 0, kind: input, shape index: {}]
  %s1 = inlined_call_operand.vmem [shape: bf16[384,128], index: 1, kind: input, shape index: {}]
  %s2 = inlined_call_operand.vmem [shape: f32[1,128], index: 2, kind: input, shape index: {}]
  %s3 = inlined_call_operand.vmem [shape: bf16[384,128], index: 3, kind: input, shape index: {}]
  %s4 = inlined_call_operand.vmem [shape: f32[1,128], index: 4, kind: input, shape index: {}]
  %s5 = inlined_call_operand.vmem [shape: bf16[384,128], index: 5, kind: input, shape index: {}]
  %s6 = inlined_call_operand.vmem [shape: f32[1,128], index: 6, kind: input, shape index: {}]
  %s7 = inlined_call_operand.vmem [shape: f32[4,128], index: 7, kind: input, shape index: {}]
  %s8 = inlined_call_operand.<no memory space> [shape: f32[1,1], index: 8, kind: input, shape index: {}]
  %s9 = inlined_call_operand.vmem [shape: f32[2,1,1], index: 9, kind: output, shape index: {}]
  %s10 = sld [smem:[#allocation0]]
  $region69: #{architecture_forward.1} parent=0
    _
  %s12 = ssub.s32 1, %s10
  %s13 = scalar_select 0, %s12, %s10
  %v14 = vstv %s8
  %15 = vst [vmem:[#allocation6] sm:$0x1] %v14
  loop: start=0, step=1, limit=4
  $region2: #{architecture_forward.1} parent=0 // loop_pre_header
    _
  $region3: #{architecture_forward.1} parent=0 // loop_header
    %s17 = sphi 0, %s21
    %p18 = scmp.ge.s32.totalorder %s17, 4
    %s27 = sphi 0, %s29
    %s30 = sphi 0, %s27
    %s31 = sphi 0, %s30
    %s47 = sphi 0, %s31
    %s51 = sphi 0, %s51
    %s53 = sphi 0, %s51
    %s54 = sphi 0, %s53
    %s68 = sphi 0, %s54
    %s72 = sphi 0, %s72
    %s74 = sphi 0, %s72
    %s75 = sphi 0, %s74
    %s89 = sphi 0, %s75
    %s93 = sphi 0, %s93
    %s95 = sphi 0, %s93
    %s96 = sphi 0, %s95
    %s110 = sphi 0, %s96
    %s114 = sphi 0, %s114
    %s116 = sphi 0, %s114
    %s117 = sphi 0, %s116
    %s131 = sphi 0, %s117
    %s135 = sphi 0, %s135
    %s137 = sphi 0, %s135
    %s138 = sphi 0, %s137
    %s152 = sphi 0, %s138
    %s156 = sphi 0, %s156
    %s158 = sphi 0, %s156
    %s159 = sphi 0, %s158
    %s173 = sphi 0, %s159
    %s177 = sphi 0, %s177
    %s179 = sphi 0, %s177
    %s180 = sphi 0, %s179
    %s194 = sphi 0, %s180
    %s198 = sphi 0, %s198
    %s200 = sphi 0, %s198
    %s201 = sphi 0, %s200
    %s215 = sphi 0, %s201
    %s221 = sphi 0, %s223
    %s224 = sphi 0, %s221
    %s225 = sphi 0, %s224
    %s241 = sphi 0, %s225
  $region4: #{architecture_forward.1} parent=0 // loop_header_branch
    %20 = sbr.rel (%p18) target = $region8
  $region5: #{architecture_forward.1} parent=0 // loop_body
    %s22 = ssub.s32 %s17, 1
    %s23 = ssub.s32 %s17, 2
    %s24 = sadd.s32 %s17, 1
    %s25 = ssub.s32 %s17, %s24
    %p26 = scmp.eq.s32.totalorder %s25, 0
    %s28 = sadd.s32 %s27, 1
    %s29 = scalar_select %p26, %s27, %s28
    %p32 = pneg %p26
    %p33 = scmp.eq.s32.totalorder %s17, 1
    %p34 = por %p32, %p33
    %p35 = scmp.ne.s32.totalorder %s27, %s30
    %p36 = scmp.eq.s32.totalorder %s17, 0
    %p37 = por %p35, %p36
    %p38 = scmp.ne.s32.totalorder %s27, %s30
    %p39 = scmp.eq.s32.totalorder %s22, 1
    %p40 = por %p38, %p39
    %p41 = scmp.ne.s32.totalorder %s30, %s31
    %p42 = scmp.eq.s32.totalorder %s22, 0
    %p43 = por %p41, %p42
    %p44 = scmp.ne.s32.totalorder %s30, %s31
    %p45 = scmp.eq.s32.totalorder %s23, 1
    %p46 = por %p44, %p45
    %p48 = scmp.ne.s32.totalorder %s31, %s47
    %p49 = scmp.eq.s32.totalorder %s23, 0
    %p50 = por %p48, %p49
    %s52 = sadd.s32 %s51, 1
    %p55 = scmp.eq.s32.totalorder %s17, 1
    %p56 = scmp.ne.s32.totalorder %s51, %s53
    %p57 = scmp.eq.s32.totalorder %s17, 0
    %p58 = por %p56, %p57
    %p59 = scmp.ne.s32.totalorder %s51, %s53
    %p60 = scmp.eq.s32.totalorder %s22, 1
    %p61 = por %p59, %p60
    %p62 = scmp.ne.s32.totalorder %s53, %s54
    %p63 = scmp.eq.s32.totalorder %s22, 0
    %p64 = por %p62, %p63
    %p65 = scmp.ne.s32.totalorder %s53, %s54
    %p66 = scmp.eq.s32.totalorder %s23, 1
    %p67 = por %p65, %p66
    %p69 = scmp.ne.s32.totalorder %s54, %s68
    %p70 = scmp.eq.s32.totalorder %s23, 0
    %p71 = por %p69, %p70
    %s73 = sadd.s32 %s72, 1
    %p76 = scmp.eq.s32.totalorder %s17, 1
    %p77 = scmp.ne.s32.totalorder %s72, %s74
    %p78 = scmp.eq.s32.totalorder %s17, 0
    %p79 = por %p77, %p78
    %p80 = scmp.ne.s32.totalorder %s72, %s74
    %p81 = scmp.eq.s32.totalorder %s22, 1
    %p82 = por %p80, %p81
    %p83 = scmp.ne.s32.totalorder %s74, %s75
    %p84 = scmp.eq.s32.totalorder %s22, 0
    %p85 = por %p83, %p84
    %p86 = scmp.ne.s32.totalorder %s74, %s75
    %p87 = scmp.eq.s32.totalorder %s23, 1
    %p88 = por %p86, %p87
    %p90 = scmp.ne.s32.totalorder %s75, %s89
    %p91 = scmp.eq.s32.totalorder %s23, 0
    %p92 = por %p90, %p91
    %s94 = sadd.s32 %s93, 1
    %p97 = scmp.eq.s32.totalorder %s17, 1
    %p98 = scmp.ne.s32.totalorder %s93, %s95
    %p99 = scmp.eq.s32.totalorder %s17, 0
    %p100 = por %p98, %p99
    %p101 = scmp.ne.s32.totalorder %s93, %s95
    %p102 = scmp.eq.s32.totalorder %s22, 1
    %p103 = por %p101, %p102
    %p104 = scmp.ne.s32.totalorder %s95, %s96
    %p105 = scmp.eq.s32.totalorder %s22, 0
    %p106 = por %p104, %p105
    %p107 = scmp.ne.s32.totalorder %s95, %s96
    %p108 = scmp.eq.s32.totalorder %s23, 1
    %p109 = por %p107, %p108
    %p111 = scmp.ne.s32.totalorder %s96, %s110
    %p112 = scmp.eq.s32.totalorder %s23, 0
    %p113 = por %p111, %p112
    %s115 = sadd.s32 %s114, 1
    %p118 = scmp.eq.s32.totalorder %s17, 1
    %p119 = scmp.ne.s32.totalorder %s114, %s116
    %p120 = scmp.eq.s32.totalorder %s17, 0
    %p121 = por %p119, %p120
    %p122 = scmp.ne.s32.totalorder %s114, %s116
    %p123 = scmp.eq.s32.totalorder %s22, 1
    %p124 = por %p122, %p123
    %p125 = scmp.ne.s32.totalorder %s116, %s117
    %p126 = scmp.eq.s32.totalorder %s22, 0
    %p127 = por %p125, %p126
    %p128 = scmp.ne.s32.totalorder %s116, %s117
    %p129 = scmp.eq.s32.totalorder %s23, 1
    %p130 = por %p128, %p129
    %p132 = scmp.ne.s32.totalorder %s117, %s131
    %p133 = scmp.eq.s32.totalorder %s23, 0
    %p134 = por %p132, %p133
    %s136 = sadd.s32 %s135, 1
    %p139 = scmp.eq.s32.totalorder %s17, 1
    %p140 = scmp.ne.s32.totalorder %s135, %s137
    %p141 = scmp.eq.s32.totalorder %s17, 0
    %p142 = por %p140, %p141
    %p143 = scmp.ne.s32.totalorder %s135, %s137
    %p144 = scmp.eq.s32.totalorder %s22, 1
    %p145 = por %p143, %p144
    %p146 = scmp.ne.s32.totalorder %s137, %s138
    %p147 = scmp.eq.s32.totalorder %s22, 0
    %p148 = por %p146, %p147
    %p149 = scmp.ne.s32.totalorder %s137, %s138
    %p150 = scmp.eq.s32.totalorder %s23, 1
    %p151 = por %p149, %p150
    %p153 = scmp.ne.s32.totalorder %s138, %s152
    %p154 = scmp.eq.s32.totalorder %s23, 0
    %p155 = por %p153, %p154
    %s157 = sadd.s32 %s156, 1
    %p160 = scmp.eq.s32.totalorder %s17, 1
    %p161 = scmp.ne.s32.totalorder %s156, %s158
    %p162 = scmp.eq.s32.totalorder %s17, 0
    %p163 = por %p161, %p162
    %p164 = scmp.ne.s32.totalorder %s156, %s158
    %p165 = scmp.eq.s32.totalorder %s22, 1
    %p166 = por %p164, %p165
    %p167 = scmp.ne.s32.totalorder %s158, %s159
    %p168 = scmp.eq.s32.totalorder %s22, 0
    %p169 = por %p167, %p168
    %p170 = scmp.ne.s32.totalorder %s158, %s159
    %p171 = scmp.eq.s32.totalorder %s23, 1
    %p172 = por %p170, %p171
    %p174 = scmp.ne.s32.totalorder %s159, %s173
    %p175 = scmp.eq.s32.totalorder %s23, 0
    %p176 = por %p174, %p175
    %s178 = sadd.s32 %s177, 1
    %p181 = scmp.eq.s32.totalorder %s17, 1
    %p182 = scmp.ne.s32.totalorder %s177, %s179
    %p183 = scmp.eq.s32.totalorder %s17, 0
    %p184 = por %p182, %p183
    %p185 = scmp.ne.s32.totalorder %s177, %s179
    %p186 = scmp.eq.s32.totalorder %s22, 1
    %p187 = por %p185, %p186
    %p188 = scmp.ne.s32.totalorder %s179, %s180
    %p189 = scmp.eq.s32.totalorder %s22, 0
    %p190 = por %p188, %p189
    %p191 = scmp.ne.s32.totalorder %s179, %s180
    %p192 = scmp.eq.s32.totalorder %s23, 1
    %p193 = por %p191, %p192
    %p195 = scmp.ne.s32.totalorder %s180, %s194
    %p196 = scmp.eq.s32.totalorder %s23, 0
    %p197 = por %p195, %p196
    %s199 = sadd.s32 %s198, 1
    %p202 = scmp.eq.s32.totalorder %s17, 1
    %p203 = scmp.ne.s32.totalorder %s198, %s200
    %p204 = scmp.eq.s32.totalorder %s17, 0
    %p205 = por %p203, %p204
    %p206 = scmp.ne.s32.totalorder %s198, %s200
    %p207 = scmp.eq.s32.totalorder %s22, 1
    %p208 = por %p206, %p207
    %p209 = scmp.ne.s32.totalorder %s200, %s201
    %p210 = scmp.eq.s32.totalorder %s22, 0
    %p211 = por %p209, %p210
    %p212 = scmp.ne.s32.totalorder %s200, %s201
    %p213 = scmp.eq.s32.totalorder %s23, 1
    %p214 = por %p212, %p213
    %p216 = scmp.ne.s32.totalorder %s201, %s215
    %p217 = scmp.eq.s32.totalorder %s23, 0
    %p218 = por %p216, %p217
    %s219 = ssub.s32 %s17, %s24
    %p220 = scmp.eq.s32.totalorder %s219, 0
    %s222 = sadd.s32 %s221, 1
    %s223 = scalar_select %p220, %s221, %s222
    %p226 = pneg %p220
    %p227 = scmp.eq.s32.totalorder %s17, 1
    %p228 = por %p226, %p227
    %p229 = scmp.ne.s32.totalorder %s221, %s224
    %p230 = scmp.eq.s32.totalorder %s17, 0
    %p231 = por %p229, %p230
    %p232 = scmp.ne.s32.totalorder %s221, %s224
    %p233 = scmp.eq.s32.totalorder %s22, 1
    %p234 = por %p232, %p233
    %p235 = scmp.ne.s32.totalorder %s224, %s225
    %p236 = scmp.eq.s32.totalorder %s22, 0
    %p237 = por %p235, %p236
    %p238 = scmp.ne.s32.totalorder %s224, %s225
    %p239 = scmp.eq.s32.totalorder %s23, 1
    %p240 = por %p238, %p239
    %p242 = scmp.ne.s32.totalorder %s225, %s241
    %p243 = scmp.eq.s32.totalorder %s23, 0
    %p244 = por %p242, %p243
    %p245 = scmp.le.s32.totalorder 1, %s17
    %p246 = scmp.lt.s32.totalorder %s17, 3
    %p247 = pnand %p245, %p246
    %p248 = pneg %p247
    // Predicated region
    $region9: #{architecture_forward.1} parent=5 // pred_check
      _
    $region10: #{architecture_forward.1} parent=5 // pred_check_branch
      %250 = sbr.rel (%p247) target = $region12
    $region11: #{architecture_forward.1} parent=5 // pred_region
      %s251 = ssub.s32 %s17, 1
      // Predicated region
      $region13: #{architecture_forward.1} parent=11 // pred_check
        %p252 = pneg %p64
      $region14: #{architecture_forward.1} parent=11 // pred_check_branch
        %254 = sbr.rel (%p252) target = $region16
      $region15: #{architecture_forward.1} parent=11 // pred_region
        _
      $region16: #{architecture_forward.1} parent=11 // pred_fallthru
        _
      // Predicated region
      $region17: #{architecture_forward.1} parent=11 // pred_check
        %p255 = pneg %p85
      $region18: #{architecture_forward.1} parent=11 // pred_check_branch
        %257 = sbr.rel (%p255) target = $region20
      $region19: #{architecture_forward.1} parent=11 // pred_region
        _
      $region20: #{architecture_forward.1} parent=11 // pred_fallthru
        _
      // Predicated region
      $region21: #{architecture_forward.1} parent=11 // pred_check
        %p258 = pneg %p106
      $region22: #{architecture_forward.1} parent=11 // pred_check_branch
        %260 = sbr.rel (%p258) target = $region24
      $region23: #{architecture_forward.1} parent=11 // pred_region
        _
      $region24: #{architecture_forward.1} parent=11 // pred_fallthru
        _
      // Predicated region
      $region25: #{architecture_forward.1} parent=11 // pred_check
        %p261 = pneg %p127
      $region26: #{architecture_forward.1} parent=11 // pred_check_branch
        %263 = sbr.rel (%p261) target = $region28
      $region27: #{architecture_forward.1} parent=11 // pred_region
        _
      $region28: #{architecture_forward.1} parent=11 // pred_fallthru
        _
      // Predicated region
      $region29: #{architecture_forward.1} parent=11 // pred_check
        %p264 = pneg %p148
      $region30: #{architecture_forward.1} parent=11 // pred_check_branch
        %266 = sbr.rel (%p264) target = $region32
      $region31: #{architecture_forward.1} parent=11 // pred_region
        _
      $region32: #{architecture_forward.1} parent=11 // pred_fallthru
        _
      // Predicated region
      $region33: #{architecture_forward.1} parent=11 // pred_check
        %p267 = pneg %p169
      $region34: #{architecture_forward.1} parent=11 // pred_check_branch
        %269 = sbr.rel (%p267) target = $region36
      $region35: #{architecture_forward.1} parent=11 // pred_region
        _
      $region36: #{architecture_forward.1} parent=11 // pred_fallthru
        _
      // Predicated region
      $region37: #{architecture_forward.1} parent=11 // pred_check
        %p270 = pneg %p190
      $region38: #{architecture_forward.1} parent=11 // pred_check_branch
        %272 = sbr.rel (%p270) target = $region40
      $region39: #{architecture_forward.1} parent=11 // pred_region
        _
      $region40: #{architecture_forward.1} parent=11 // pred_fallthru
        _
      // Predicated region
      $region41: #{architecture_forward.1} parent=11 // pred_check
        %p273 = pneg %p211
      $region42: #{architecture_forward.1} parent=11 // pred_check_branch
        %275 = sbr.rel (%p273) target = $region44
      $region43: #{architecture_forward.1} parent=11 // pred_region
        _
      $region44: #{architecture_forward.1} parent=11 // pred_fallthru
        _
    $region12: #{architecture_forward.1} parent=5 // pred_fallthru
      _
    %p276 = scmp.lt.s32.totalorder %s17, 2
    // Predicated region
    $region45: #{architecture_forward.1} parent=5 // pred_check
      %p277 = pneg %p276
    $region46: #{architecture_forward.1} parent=5 // pred_check_branch
      %279 = sbr.rel (%p277) target = $region48
    $region47: #{architecture_forward.1} parent=5 // pred_region
      // Predicated region
      $region49: #{architecture_forward.1} parent=47 // pred_check
        %p280 = pneg %p37
      $region50: #{architecture_forward.1} parent=47 // pred_check_branch
        %282 = sbr.rel (%p280) target = $region52
      $region51: #{architecture_forward.1} parent=47 // pred_region
        %p283 = scmp.lt.s32.totalorder %s17, 1
        %s284 = scalar_select %p283, %s17, 1
        %s285 = smul.addr %s284, 3
        %s286 = smul.addr %s285, 8
        %s287 = scalar_lea.vmem %s0, %s286
      $region52: #{architecture_forward.1} parent=47 // pred_fallthru
        _
    $region48: #{architecture_forward.1} parent=5 // pred_fallthru
      _
    %p288 = scmp.le.s32.totalorder 1, %s17
    %p289 = scmp.lt.s32.totalorder %s17, 3
    %p290 = pnand %p288, %p289
    %p291 = pneg %p290
    // Predicated region
    $region53: #{architecture_forward.1} parent=5 // pred_check
      _
    $region54: #{architecture_forward.1} parent=5 // pred_check_branch
      %293 = sbr.rel (%p290) target = $region56
    $region55: #{architecture_forward.1} parent=5 // pred_region
      %s294 = ssub.s32 %s17, 1
      %p295 = scmp.lt.s32.totalorder %s22, 1
      %s296 = scalar_select %p295, %s22, 1
      %s297 = smul.addr %s296, 3
      %s298 = smul.addr %s297, 8
      %s299 = scalar_lea.vmem %s0, %s298
      %p300 = pneg %p43
      %p301 = pneg %p40
      %p302 = pneg %p64
      %p303 = pneg %p61
      %p304 = pneg %p85
      %p305 = pneg %p82
      %p306 = pneg %p106
      %p307 = pneg %p103
      %p308 = pneg %p127
      %p309 = pneg %p124
      %p310 = pneg %p148
      %p311 = pneg %p145
      %p312 = pneg %p169
      %p313 = pneg %p166
      %p314 = pneg %p190
      %p315 = pneg %p187
      %p316 = pneg %p211
      %p317 = pneg %p208
      %p318 = pneg %p237
      %p319 = pneg %p234
      %p320 = scmp.lt.s32.totalorder %s22, 1
      %s321 = scalar_select %p320, %s22, 1
      %s322 = scalar_lea.vmem %s9, %s321
      %p323 = scmp.lt.s32.totalorder %s22, 1
      %s324 = scalar_select %p323, %s22, 1
      %s325 = smul.addr %s324, 3
      %s326 = smul.addr %s325, 8
      %s327 = scalar_lea.vmem %s0, %s326
      %p328 = scmp.lt.s32.totalorder %s22, 1
      %s329 = scalar_select %p328, %s22, 1
      %s330 = scalar_lea.vmem %s9, %s329
      %v331 = vld [vmem:[%s327] sm:$0xff]
      %v332 = vld [vmem:[%s327 + $0x8] sm:$0xff]
      %v333 = vld [vmem:[%s327 + $0x1] sm:$0xff]
      %v334 = vld [vmem:[%s327 + $0x9] sm:$0xff]
      %v335 = vld [vmem:[%s327 + $0x2] sm:$0xff]
      %v336 = vld [vmem:[%s327 + $0xa] sm:$0xff]
      %v337 = vpack.c.bf16 %v332, %v331
      %v338 = vpack.c.bf16 %v334, %v333
      %v339 = vpack.c.bf16 %v336, %v335
      %v340 = vld [vmem:[%s1] sm:$0xf]
      %v341 = vld [vmem:[%s1 + $0x4] sm:$0xf]
      %v342 = vld [vmem:[%s1 + $0x8] sm:$0xf]
      %v343 = vld [vmem:[%s1 + $0xc] sm:$0xf]
      %v344 = vld [vmem:[%s1 + $0x10] sm:$0xf]
      %v345 = vld [vmem:[%s1 + $0x14] sm:$0xf]
      %v346 = vld [vmem:[%s1 + $0x18] sm:$0xf]
      %v347 = vld [vmem:[%s1 + $0x1c] sm:$0xf]
      %v348 = vld [vmem:[%s1 + $0x20] sm:$0xf]
      %v349 = vld [vmem:[%s1 + $0x24] sm:$0xf]
      %v350 = vld [vmem:[%s1 + $0x28] sm:$0xf]
      %v351 = vld [vmem:[%s1 + $0x2c] sm:$0xf]
      %v352 = vld [vmem:[%s1 + $0x30] sm:$0xf]
      %v353 = vld [vmem:[%s1 + $0x34] sm:$0xf]
      %v354 = vld [vmem:[%s1 + $0x38] sm:$0xf]
      %v355 = vld [vmem:[%s1 + $0x3c] sm:$0xf]
      %v356 = vld [vmem:[%s1 + $0x40] sm:$0xf]
      %v357 = vld [vmem:[%s1 + $0x44] sm:$0xf]
      %v358 = vld [vmem:[%s1 + $0x48] sm:$0xf]
      %v359 = vld [vmem:[%s1 + $0x4c] sm:$0xf]
      %v360 = vld [vmem:[%s1 + $0x50] sm:$0xf]
      %v361 = vld [vmem:[%s1 + $0x54] sm:$0xf]
      %v362 = vld [vmem:[%s1 + $0x58] sm:$0xf]
      %v363 = vld [vmem:[%s1 + $0x5c] sm:$0xf]
      %v364 = vld [vmem:[%s1 + $0x60] sm:$0xf]
      %v365 = vld [vmem:[%s1 + $0x64] sm:$0xf]
      %v366 = vld [vmem:[%s1 + $0x68] sm:$0xf]
      %v367 = vld [vmem:[%s1 + $0x6c] sm:$0xf]
      %v368 = vld [vmem:[%s1 + $0x70] sm:$0xf]
      %v369 = vld [vmem:[%s1 + $0x74] sm:$0xf]
      %v370 = vld [vmem:[%s1 + $0x78] sm:$0xf]
      %v371 = vld [vmem:[%s1 + $0x7c] sm:$0xf]
      %v372 = vld [vmem:[%s1 + $0x80] sm:$0xf]
      %v373 = vld [vmem:[%s1 + $0x84] sm:$0xf]
      %v374 = vld [vmem:[%s1 + $0x88] sm:$0xf]
      %v375 = vld [vmem:[%s1 + $0x8c] sm:$0xf]
      %v376 = vld [vmem:[%s1 + $0x90] sm:$0xf]
      %v377 = vld [vmem:[%s1 + $0x94] sm:$0xf]
      %v378 = vld [vmem:[%s1 + $0x98] sm:$0xf]
      %v379 = vld [vmem:[%s1 + $0x9c] sm:$0xf]
      %v380 = vld [vmem:[%s1 + $0xa0] sm:$0xf]
      %v381 = vld [vmem:[%s1 + $0xa4] sm:$0xf]
      %v382 = vld [vmem:[%s1 + $0xa8] sm:$0xf]
      %v383 = vld [vmem:[%s1 + $0xac] sm:$0xf]
      %v384 = vld [vmem:[%s1 + $0xb0] sm:$0xf]
      %v385 = vld [vmem:[%s1 + $0xb4] sm:$0xf]
      %v386 = vld [vmem:[%s1 + $0xb8] sm:$0xf]
      %v387 = vld [vmem:[%s1 + $0xbc] sm:$0xf]
      %v388 = vld [vmem:[%s2] sm:$0x1]
      %v390 = vperm.slane %v388, 0
      %v440 = vunpack.c.l.b16 %v340
      %v441 = vunpack.c.l.b16 %v341
      %v442 = vunpack.c.l.b16 %v342
      %v443 = vunpack.c.l.b16 %v343
      %v444 = vunpack.c.l.b16 %v344
      %v445 = vunpack.c.l.b16 %v345
      %v446 = vunpack.c.l.b16 %v346
      %v447 = vunpack.c.l.b16 %v347
      %v448 = vunpack.c.l.b16 %v348
      %v449 = vunpack.c.l.b16 %v349
      %v450 = vunpack.c.l.b16 %v350
      %v451 = vunpack.c.l.b16 %v351
      %v452 = vunpack.c.l.b16 %v352
      %v453 = vunpack.c.l.b16 %v353
      %v454 = vunpack.c.l.b16 %v354
      %v455 = vunpack.c.l.b16 %v355
      %v456 = vunpack.c.l.b16 %v356
      %v457 = vunpack.c.l.b16 %v357
      %v458 = vunpack.c.l.b16 %v358
      %v459 = vunpack.c.l.b16 %v359
      %v460 = vunpack.c.l.b16 %v360
      %v461 = vunpack.c.l.b16 %v361
      %v462 = vunpack.c.l.b16 %v362
      %v463 = vunpack.c.l.b16 %v363
      %v464 = vunpack.c.l.b16 %v364
      %v465 = vunpack.c.l.b16 %v365
      %v466 = vunpack.c.l.b16 %v366
      %v467 = vunpack.c.l.b16 %v367
      %v468 = vunpack.c.l.b16 %v368
      %v469 = vunpack.c.l.b16 %v369
      %v470 = vunpack.c.l.b16 %v370
      %v471 = vunpack.c.l.b16 %v371
      %v472 = vunpack.c.l.b16 %v372
      %v473 = vunpack.c.l.b16 %v373
      %v474 = vunpack.c.l.b16 %v374
      %v475 = vunpack.c.l.b16 %v375
      %v476 = vunpack.c.l.b16 %v376
      %v477 = vunpack.c.l.b16 %v377
      %v478 = vunpack.c.l.b16 %v378
      %v479 = vunpack.c.l.b16 %v379
      %v480 = vunpack.c.l.b16 %v380
      %v481 = vunpack.c.l.b16 %v381
      %v482 = vunpack.c.l.b16 %v382
      %v483 = vunpack.c.l.b16 %v383
      %v484 = vunpack.c.l.b16 %v384
      %v485 = vunpack.c.l.b16 %v385
      %v486 = vunpack.c.l.b16 %v386
      %v487 = vunpack.c.l.b16 %v387
      %v488 = vpack.c.b16 %v441, %v440
      %v489 = vpack.c.b16 %v443, %v442
      %v490 = vpack.c.b16 %v445, %v444
      %v491 = vpack.c.b16 %v447, %v446
      %v492 = vpack.c.b16 %v449, %v448
      %v493 = vpack.c.b16 %v451, %v450
      %v494 = vpack.c.b16 %v453, %v452
      %v495 = vpack.c.b16 %v455, %v454
      %v496 = vpack.c.b16 %v457, %v456
      %v497 = vpack.c.b16 %v459, %v458
      %v498 = vpack.c.b16 %v461, %v460
      %v499 = vpack.c.b16 %v463, %v462
      %v500 = vpack.c.b16 %v465, %v464
      %v501 = vpack.c.b16 %v467, %v466
      %v502 = vpack.c.b16 %v469, %v468
      %v503 = vpack.c.b16 %v471, %v470
      %v504 = vpack.c.b16 %v473, %v472
      %v505 = vpack.c.b16 %v475, %v474
      %v506 = vpack.c.b16 %v477, %v476
      %v507 = vpack.c.b16 %v479, %v478
      %v508 = vpack.c.b16 %v481, %v480
      %v509 = vpack.c.b16 %v483, %v482
      %v510 = vpack.c.b16 %v485, %v484
      %v511 = vpack.c.b16 %v487, %v486
      %536 = vmatpush.bf16.msra.mxu0 %v495
      %537 = vmatpush.bf16.msra.mxu0 %v494
      %538 = vmatpush.bf16.msra.mxu0 %v493
      %539 = vmatpush.bf16.msra.mxu0 %v492
      %540 = vmatpush.bf16.msra.mxu0 %v491
      %541 = vmatpush.bf16.msra.mxu0 %v490
      %542 = vmatpush.bf16.msra.mxu0 %v489
      %543 = vmatpush.bf16.msra.mxu0 %v488
      %544 = vmatmul.bf16.gmra.mxu0 %v337
      %v545 = vpop.f32.mrf.mxu0
      %v546 = vadd.f32 %v390, %v545
      %v547 = vpop.f32.mrf.mxu0
      %v548 = vadd.f32 %v390, %v547
      %549 = vdwg.mxu0
      %550 = vmatpush.bf16.msra.mxu0 %v503
      %551 = vmatpush.bf16.msra.mxu0 %v502
      %552 = vmatpush.bf16.msra.mxu0 %v501
      %553 = vmatpush.bf16.msra.mxu0 %v500
      %554 = vmatpush.bf16.msra.mxu0 %v499
      %555 = vmatpush.bf16.msra.mxu0 %v498
      %556 = vmatpush.bf16.msra.mxu0 %v497
      %557 = vmatpush.bf16.msra.mxu0 %v496
      %558 = vmatmul.bf16.gmra.mxu0 %v338
      %v559 = vpop.f32.mrf.mxu0
      %v560 = vadd.f32 %v546, %v559
      %v561 = vpop.f32.mrf.mxu0
      %v562 = vadd.f32 %v548, %v561
      %563 = vdwg.mxu0
      %564 = vmatpush.bf16.msra.mxu0 %v511
      %565 = vmatpush.bf16.msra.mxu0 %v510
      %566 = vmatpush.bf16.msra.mxu0 %v509
      %567 = vmatpush.bf16.msra.mxu0 %v508
      %568 = vmatpush.bf16.msra.mxu0 %v507
      %569 = vmatpush.bf16.msra.mxu0 %v506
      %570 = vmatpush.bf16.msra.mxu0 %v505
      %571 = vmatpush.bf16.msra.mxu0 %v504
      %572 = vmatmul.bf16.gmra.mxu0 %v339
      %v573 = vpop.f32.mrf.mxu0
      %v574 = vadd.f32 %v560, %v573
      %v575 = vpop.f32.mrf.mxu0
      %v576 = vadd.f32 %v562, %v575
      %577 = vdwg.mxu0
      %v578 = vmax.f32 %v574, 0.0
      %v579 = vmax.f32 %v576, 0.0
      %580 = vst [vmem:[#allocation2] sm:$0xff] %v578
      %581 = vst [vmem:[#allocation2 + $0x8] sm:$0xff] %v579
      %v582 = vld [vmem:[#allocation2] ss:$2 sm:$0xff]
      %s583 = scalar_lea.vmem [#allocation2], 1
      %v584 = vld [vmem:[%s583] ss:$2 sm:$0xff]
      %v585 = vmax.f32 %v582, %v584
      %587 = vrot.lane.b32.xlu0 %v585, 127
      %v588 = vpop.permute.xlu0 %587
      %v590 = vmax.f32 %v585, %v588
      %v592 = vrot.slane %v590, 7
      %vm594 = vcmask 1040384
      %v595 = vsel %vm594, 0.0, %v592
      %v596 = vsel %vm594, %v592, 0.0
      %597 = vst [vmem:[#allocation4] sm:$0xff] %v595
      %598 = vst [vmem:[#allocation4 + $0x8] sm:$0x3] %v596
      %v599 = vld [vmem:[#allocation4] sm:$0xff]
      %v600 = vld [vmem:[#allocation4 + $0x1] sm:$0xff]
      %v601 = vld [vmem:[#allocation4 + $0x2] sm:$0xff]
      %v602 = vpack.c.bf16 %v599, %v599
      %v603 = vpack.c.bf16 %v600, %v600
      %v604 = vpack.c.bf16 %v601, %v601
      %v605 = vld [vmem:[%s3] sm:$0xf]
      %v606 = vld [vmem:[%s3 + $0x4] sm:$0xf]
      %v607 = vld [vmem:[%s3 + $0x8] sm:$0xf]
      %v608 = vld [vmem:[%s3 + $0xc] sm:$0xf]
      %v609 = vld [vmem:[%s3 + $0x10] sm:$0xf]
      %v610 = vld [vmem:[%s3 + $0x14] sm:$0xf]
      %v611 = vld [vmem:[%s3 + $0x18] sm:$0xf]
      %v612 = vld [vmem:[%s3 + $0x1c] sm:$0xf]
      %v613 = vld [vmem:[%s3 + $0x20] sm:$0xf]
      %v614 = vld [vmem:[%s3 + $0x24] sm:$0xf]
      %v615 = vld [vmem:[%s3 + $0x28] sm:$0xf]
      %v616 = vld [vmem:[%s3 + $0x2c] sm:$0xf]
      %v617 = vld [vmem:[%s3 + $0x30] sm:$0xf]
      %v618 = vld [vmem:[%s3 + $0x34] sm:$0xf]
      %v619 = vld [vmem:[%s3 + $0x38] sm:$0xf]
      %v620 = vld [vmem:[%s3 + $0x3c] sm:$0xf]
      %v621 = vld [vmem:[%s3 + $0x40] sm:$0xf]
      %v622 = vld [vmem:[%s3 + $0x44] sm:$0xf]
      %v623 = vld [vmem:[%s3 + $0x48] sm:$0xf]
      %v624 = vld [vmem:[%s3 + $0x4c] sm:$0xf]
      %v625 = vld [vmem:[%s3 + $0x50] sm:$0xf]
      %v626 = vld [vmem:[%s3 + $0x54] sm:$0xf]
      %v627 = vld [vmem:[%s3 + $0x58] sm:$0xf]
      %v628 = vld [vmem:[%s3 + $0x5c] sm:$0xf]
      %v629 = vld [vmem:[%s3 + $0x60] sm:$0xf]
      %v630 = vld [vmem:[%s3 + $0x64] sm:$0xf]
      %v631 = vld [vmem:[%s3 + $0x68] sm:$0xf]
      %v632 = vld [vmem:[%s3 + $0x6c] sm:$0xf]
      %v633 = vld [vmem:[%s3 + $0x70] sm:$0xf]
      %v634 = vld [vmem:[%s3 + $0x74] sm:$0xf]
      %v635 = vld [vmem:[%s3 + $0x78] sm:$0xf]
      %v636 = vld [vmem:[%s3 + $0x7c] sm:$0xf]
      %v637 = vld [vmem:[%s3 + $0x80] sm:$0xf]
      %v638 = vld [vmem:[%s3 + $0x84] sm:$0xf]
      %v639 = vld [vmem:[%s3 + $0x88] sm:$0xf]
      %v640 = vld [vmem:[%s3 + $0x8c] sm:$0xf]
      %v641 = vld [vmem:[%s3 + $0x90] sm:$0xf]
      %v642 = vld [vmem:[%s3 + $0x94] sm:$0xf]
      %v643 = vld [vmem:[%s3 + $0x98] sm:$0xf]
      %v644 = vld [vmem:[%s3 + $0x9c] sm:$0xf]
      %v645 = vld [vmem:[%s3 + $0xa0] sm:$0xf]
      %v646 = vld [vmem:[%s3 + $0xa4] sm:$0xf]
      %v647 = vld [vmem:[%s3 + $0xa8] sm:$0xf]
      %v648 = vld [vmem:[%s3 + $0xac] sm:$0xf]
      %v649 = vld [vmem:[%s3 + $0xb0] sm:$0xf]
      %v650 = vld [vmem:[%s3 + $0xb4] sm:$0xf]
      %v651 = vld [vmem:[%s3 + $0xb8] sm:$0xf]
      %v652 = vld [vmem:[%s3 + $0xbc] sm:$0xf]
      %v653 = vld [vmem:[%s4] sm:$0x1]
      %v655 = vperm.slane %v653, 0
      %v705 = vunpack.c.l.b16 %v605
      %v706 = vunpack.c.l.b16 %v606
      %v707 = vunpack.c.l.b16 %v607
      %v708 = vunpack.c.l.b16 %v608
      %v709 = vunpack.c.l.b16 %v609
      %v710 = vunpack.c.l.b16 %v610
      %v711 = vunpack.c.l.b16 %v611
      %v712 = vunpack.c.l.b16 %v612
      %v713 = vunpack.c.l.b16 %v613
      %v714 = vunpack.c.l.b16 %v614
      %v715 = vunpack.c.l.b16 %v615
      %v716 = vunpack.c.l.b16 %v616
      %v717 = vunpack.c.l.b16 %v617
      %v718 = vunpack.c.l.b16 %v618
      %v719 = vunpack.c.l.b16 %v619
      %v720 = vunpack.c.l.b16 %v620
      %v721 = vunpack.c.l.b16 %v621
      %v722 = vunpack.c.l.b16 %v622
      %v723 = vunpack.c.l.b16 %v623
      %v724 = vunpack.c.l.b16 %v624
      %v725 = vunpack.c.l.b16 %v625
      %v726 = vunpack.c.l.b16 %v626
      %v727 = vunpack.c.l.b16 %v627
      %v728 = vunpack.c.l.b16 %v628
      %v729 = vunpack.c.l.b16 %v629
      %v730 = vunpack.c.l.b16 %v630
      %v731 = vunpack.c.l.b16 %v631
      %v732 = vunpack.c.l.b16 %v632
      %v733 = vunpack.c.l.b16 %v633
      %v734 = vunpack.c.l.b16 %v634
      %v735 = vunpack.c.l.b16 %v635
      %v736 = vunpack.c.l.b16 %v636
      %v737 = vunpack.c.l.b16 %v637
      %v738 = vunpack.c.l.b16 %v638
      %v739 = vunpack.c.l.b16 %v639
      %v740 = vunpack.c.l.b16 %v640
      %v741 = vunpack.c.l.b16 %v641
      %v742 = vunpack.c.l.b16 %v642
      %v743 = vunpack.c.l.b16 %v643
      %v744 = vunpack.c.l.b16 %v644
      %v745 = vunpack.c.l.b16 %v645
      %v746 = vunpack.c.l.b16 %v646
      %v747 = vunpack.c.l.b16 %v647
      %v748 = vunpack.c.l.b16 %v648
      %v749 = vunpack.c.l.b16 %v649
      %v750 = vunpack.c.l.b16 %v650
      %v751 = vunpack.c.l.b16 %v651
      %v752 = vunpack.c.l.b16 %v652
      %v753 = vpack.c.b16 %v706, %v705
      %v754 = vpack.c.b16 %v708, %v707
      %v755 = vpack.c.b16 %v710, %v709
      %v756 = vpack.c.b16 %v712, %v711
      %v757 = vpack.c.b16 %v714, %v713
      %v758 = vpack.c.b16 %v716, %v715
      %v759 = vpack.c.b16 %v718, %v717
      %v760 = vpack.c.b16 %v720, %v719
      %v761 = vpack.c.b16 %v722, %v721
      %v762 = vpack.c.b16 %v724, %v723
      %v763 = vpack.c.b16 %v726, %v725
      %v764 = vpack.c.b16 %v728, %v727
      %v765 = vpack.c.b16 %v730, %v729
      %v766 = vpack.c.b16 %v732, %v731
      %v767 = vpack.c.b16 %v734, %v733
      %v768 = vpack.c.b16 %v736, %v735
      %v769 = vpack.c.b16 %v738, %v737
      %v770 = vpack.c.b16 %v740, %v739
      %v771 = vpack.c.b16 %v742, %v741
      %v772 = vpack.c.b16 %v744, %v743
      %v773 = vpack.c.b16 %v746, %v745
      %v774 = vpack.c.b16 %v748, %v747
      %v775 = vpack.c.b16 %v750, %v749
      %v776 = vpack.c.b16 %v752, %v751
      %801 = vmatpush.bf16.msra.mxu0 %v760
      %802 = vmatpush.bf16.msra.mxu0 %v759
      %803 = vmatpush.bf16.msra.mxu0 %v758
      %804 = vmatpush.bf16.msra.mxu0 %v757
      %805 = vmatpush.bf16.msra.mxu0 %v756
      %806 = vmatpush.bf16.msra.mxu0 %v755
      %807 = vmatpush.bf16.msra.mxu0 %v754
      %808 = vmatpush.bf16.msra.mxu0 %v753
      %809 = vmatmul.bf16.gmra.mxu0 %v602
      %v810 = vpop.f32.mrf.mxu0
      %v811 = vadd.f32 %v655, %v810
      %v812 = vpop.f32.mrf.mxu0
      %813 = vdwg.mxu0
      %814 = vmatpush.bf16.msra.mxu0 %v768
      %815 = vmatpush.bf16.msra.mxu0 %v767
      %816 = vmatpush.bf16.msra.mxu0 %v766
      %817 = vmatpush.bf16.msra.mxu0 %v765
      %818 = vmatpush.bf16.msra.mxu0 %v764
      %819 = vmatpush.bf16.msra.mxu0 %v763
      %820 = vmatpush.bf16.msra.mxu0 %v762
      %821 = vmatpush.bf16.msra.mxu0 %v761
      %822 = vmatmul.bf16.gmra.mxu0 %v603
      %v823 = vpop.f32.mrf.mxu0
      %v824 = vadd.f32 %v811, %v823
      %v825 = vpop.f32.mrf.mxu0
      %826 = vdwg.mxu0
      %827 = vmatpush.bf16.msra.mxu0 %v776
      %828 = vmatpush.bf16.msra.mxu0 %v775
      %829 = vmatpush.bf16.msra.mxu0 %v774
      %830 = vmatpush.bf16.msra.mxu0 %v773
      %831 = vmatpush.bf16.msra.mxu0 %v772
      %832 = vmatpush.bf16.msra.mxu0 %v771
      %833 = vmatpush.bf16.msra.mxu0 %v770
      %834 = vmatpush.bf16.msra.mxu0 %v769
      %835 = vmatmul.bf16.gmra.mxu0 %v604
      %v836 = vpop.f32.mrf.mxu0
      %v837 = vadd.f32 %v824, %v836
      %v838 = vpop.f32.mrf.mxu0
      %839 = vdwg.mxu0
      %v840 = vmax.f32 %v837, 0.0
      %841 = vst [vmem:[#allocation3] sm:$0xff] %v840
      %v842 = vld [vmem:[#allocation3] ss:$2 sm:$0xf]
      %s843 = scalar_lea.vmem [#allocation3], 1
      %v844 = vld [vmem:[%s843] ss:$2 sm:$0xf]
      %v845 = vmax.f32 %v842, %v844
      %847 = vrot.lane.b32.xlu0 %v845, 127
      %v848 = vpop.permute.xlu0 %847
      %v850 = vmax.f32 %v845, %v848
      %v852 = vrot.slane %v850, 7
      %v854 = vsel %vm594, 0.0, %v852
      %vm855 = vcmask 1044480
      %v856 = vsel %vm855, %v854, 0.0
      %857 = vst [vmem:[#allocation5] sm:$0x3f] %v856
      %v858 = vld [vmem:[#allocation5] sm:$0xf]
      %v859 = vld [vmem:[#allocation5 + $0x1] sm:$0xf]
      %v860 = vld [vmem:[#allocation5 + $0x2] sm:$0xf]
      %v861 = vpack.c.bf16 %v858, %v858
      %v862 = vpack.c.bf16 %v859, %v859
      %v863 = vpack.c.bf16 %v860, %v860
      %v864 = vld [vmem:[%s5] sm:$0xf]
      %v865 = vld [vmem:[%s5 + $0x4] sm:$0xf]
      %v866 = vld [vmem:[%s5 + $0x8] sm:$0xf]
      %v867 = vld [vmem:[%s5 + $0xc] sm:$0xf]
      %v868 = vld [vmem:[%s5 + $0x10] sm:$0xf]
      %v869 = vld [vmem:[%s5 + $0x14] sm:$0xf]
      %v870 = vld [vmem:[%s5 + $0x18] sm:$0xf]
      %v871 = vld [vmem:[%s5 + $0x1c] sm:$0xf]
      %v872 = vld [vmem:[%s5 + $0x20] sm:$0xf]
      %v873 = vld [vmem:[%s5 + $0x24] sm:$0xf]
      %v874 = vld [vmem:[%s5 + $0x28] sm:$0xf]
      %v875 = vld [vmem:[%s5 + $0x2c] sm:$0xf]
      %v876 = vld [vmem:[%s5 + $0x30] sm:$0xf]
      %v877 = vld [vmem:[%s5 + $0x34] sm:$0xf]
      %v878 = vld [vmem:[%s5 + $0x38] sm:$0xf]
      %v879 = vld [vmem:[%s5 + $0x3c] sm:$0xf]
      %v880 = vld [vmem:[%s5 + $0x40] sm:$0xf]
      %v881 = vld [vmem:[%s5 + $0x44] sm:$0xf]
      %v882 = vld [vmem:[%s5 + $0x48] sm:$0xf]
      %v883 = vld [vmem:[%s5 + $0x4c] sm:$0xf]
      %v884 = vld [vmem:[%s5 + $0x50] sm:$0xf]
      %v885 = vld [vmem:[%s5 + $0x54] sm:$0xf]
      %v886 = vld [vmem:[%s5 + $0x58] sm:$0xf]
      %v887 = vld [vmem:[%s5 + $0x5c] sm:$0xf]
      %v888 = vld [vmem:[%s5 + $0x60] sm:$0xf]
      %v889 = vld [vmem:[%s5 + $0x64] sm:$0xf]
      %v890 = vld [vmem:[%s5 + $0x68] sm:$0xf]
      %v891 = vld [vmem:[%s5 + $0x6c] sm:$0xf]
      %v892 = vld [vmem:[%s5 + $0x70] sm:$0xf]
      %v893 = vld [vmem:[%s5 + $0x74] sm:$0xf]
      %v894 = vld [vmem:[%s5 + $0x78] sm:$0xf]
      %v895 = vld [vmem:[%s5 + $0x7c] sm:$0xf]
      %v896 = vld [vmem:[%s5 + $0x80] sm:$0xf]
      %v897 = vld [vmem:[%s5 + $0x84] sm:$0xf]
      %v898 = vld [vmem:[%s5 + $0x88] sm:$0xf]
      %v899 = vld [vmem:[%s5 + $0x8c] sm:$0xf]
      %v900 = vld [vmem:[%s5 + $0x90] sm:$0xf]
      %v901 = vld [vmem:[%s5 + $0x94] sm:$0xf]
      %v902 = vld [vmem:[%s5 + $0x98] sm:$0xf]
      %v903 = vld [vmem:[%s5 + $0x9c] sm:$0xf]
      %v904 = vld [vmem:[%s5 + $0xa0] sm:$0xf]
      %v905 = vld [vmem:[%s5 + $0xa4] sm:$0xf]
      %v906 = vld [vmem:[%s5 + $0xa8] sm:$0xf]
      %v907 = vld [vmem:[%s5 + $0xac] sm:$0xf]
      %v908 = vld [vmem:[%s5 + $0xb0] sm:$0xf]
      %v909 = vld [vmem:[%s5 + $0xb4] sm:$0xf]
      %v910 = vld [vmem:[%s5 + $0xb8] sm:$0xf]
      %v911 = vld [vmem:[%s5 + $0xbc] sm:$0xf]
      %v912 = vld [vmem:[%s6] sm:$0x1]
      %v914 = vperm.slane %v912, 0
      %v964 = vunpack.c.l.b16 %v864
      %v965 = vunpack.c.l.b16 %v865
      %v966 = vunpack.c.l.b16 %v866
      %v967 = vunpack.c.l.b16 %v867
      %v968 = vunpack.c.l.b16 %v868
      %v969 = vunpack.c.l.b16 %v869
      %v970 = vunpack.c.l.b16 %v870
      %v971 = vunpack.c.l.b16 %v871
      %v972 = vunpack.c.l.b16 %v872
      %v973 = vunpack.c.l.b16 %v873
      %v974 = vunpack.c.l.b16 %v874
      %v975 = vunpack.c.l.b16 %v875
      %v976 = vunpack.c.l.b16 %v876
      %v977 = vunpack.c.l.b16 %v877
      %v978 = vunpack.c.l.b16 %v878
      %v979 = vunpack.c.l.b16 %v879
      %v980 = vunpack.c.l.b16 %v880
      %v981 = vunpack.c.l.b16 %v881
      %v982 = vunpack.c.l.b16 %v882
      %v983 = vunpack.c.l.b16 %v883
      %v984 = vunpack.c.l.b16 %v884
      %v985 = vunpack.c.l.b16 %v885
      %v986 = vunpack.c.l.b16 %v886
      %v987 = vunpack.c.l.b16 %v887
      %v988 = vunpack.c.l.b16 %v888
      %v989 = vunpack.c.l.b16 %v889
      %v990 = vunpack.c.l.b16 %v890
      %v991 = vunpack.c.l.b16 %v891
      %v992 = vunpack.c.l.b16 %v892
      %v993 = vunpack.c.l.b16 %v893
      %v994 = vunpack.c.l.b16 %v894
      %v995 = vunpack.c.l.b16 %v895
      %v996 = vunpack.c.l.b16 %v896
      %v997 = vunpack.c.l.b16 %v897
      %v998 = vunpack.c.l.b16 %v898
      %v999 = vunpack.c.l.b16 %v899
      %v1000 = vunpack.c.l.b16 %v900
      %v1001 = vunpack.c.l.b16 %v901
      %v1002 = vunpack.c.l.b16 %v902
      %v1003 = vunpack.c.l.b16 %v903
      %v1004 = vunpack.c.l.b16 %v904
      %v1005 = vunpack.c.l.b16 %v905
      %v1006 = vunpack.c.l.b16 %v906
      %v1007 = vunpack.c.l.b16 %v907
      %v1008 = vunpack.c.l.b16 %v908
      %v1009 = vunpack.c.l.b16 %v909
      %v1010 = vunpack.c.l.b16 %v910
      %v1011 = vunpack.c.l.b16 %v911
      %v1012 = vpack.c.b16 %v965, %v964
      %v1013 = vpack.c.b16 %v967, %v966
      %v1014 = vpack.c.b16 %v969, %v968
      %v1015 = vpack.c.b16 %v971, %v970
      %v1016 = vpack.c.b16 %v973, %v972
      %v1017 = vpack.c.b16 %v975, %v974
      %v1018 = vpack.c.b16 %v977, %v976
      %v1019 = vpack.c.b16 %v979, %v978
      %v1020 = vpack.c.b16 %v981, %v980
      %v1021 = vpack.c.b16 %v983, %v982
      %v1022 = vpack.c.b16 %v985, %v984
      %v1023 = vpack.c.b16 %v987, %v986
      %v1024 = vpack.c.b16 %v989, %v988
      %v1025 = vpack.c.b16 %v991, %v990
      %v1026 = vpack.c.b16 %v993, %v992
      %v1027 = vpack.c.b16 %v995, %v994
      %v1028 = vpack.c.b16 %v997, %v996
      %v1029 = vpack.c.b16 %v999, %v998
      %v1030 = vpack.c.b16 %v1001, %v1000
      %v1031 = vpack.c.b16 %v1003, %v1002
      %v1032 = vpack.c.b16 %v1005, %v1004
      %v1033 = vpack.c.b16 %v1007, %v1006
      %v1034 = vpack.c.b16 %v1009, %v1008
      %v1035 = vpack.c.b16 %v1011, %v1010
      %1060 = vmatpush.bf16.msra.mxu0 %v1019
      %1061 = vmatpush.bf16.msra.mxu0 %v1018
      %1062 = vmatpush.bf16.msra.mxu0 %v1017
      %1063 = vmatpush.bf16.msra.mxu0 %v1016
      %1064 = vmatpush.bf16.msra.mxu0 %v1015
      %1065 = vmatpush.bf16.msra.mxu0 %v1014
      %1066 = vmatpush.bf16.msra.mxu0 %v1013
      %1067 = vmatpush.bf16.msra.mxu0 %v1012
      %1068 = vmatmul.bf16.gmra.mxu0 %v861
      %v1069 = vpop.f32.mrf.mxu0
      %v1070 = vadd.f32 %v914, %v1069
      %v1071 = vpop.f32.mrf.mxu0
      %1072 = vdwg.mxu0
      %1073 = vmatpush.bf16.msra.mxu0 %v1027
      %1074 = vmatpush.bf16.msra.mxu0 %v1026
      %1075 = vmatpush.bf16.msra.mxu0 %v1025
      %1076 = vmatpush.bf16.msra.mxu0 %v1024
      %1077 = vmatpush.bf16.msra.mxu0 %v1023
      %1078 = vmatpush.bf16.msra.mxu0 %v1022
      %1079 = vmatpush.bf16.msra.mxu0 %v1021
      %1080 = vmatpush.bf16.msra.mxu0 %v1020
      %1081 = vmatmul.bf16.gmra.mxu0 %v862
      %v1082 = vpop.f32.mrf.mxu0
      %v1083 = vadd.f32 %v1070, %v1082
      %v1084 = vpop.f32.mrf.mxu0
      %1085 = vdwg.mxu0
      %1086 = vmatpush.bf16.msra.mxu0 %v1035
      %1087 = vmatpush.bf16.msra.mxu0 %v1034
      %1088 = vmatpush.bf16.msra.mxu0 %v1033
      %1089 = vmatpush.bf16.msra.mxu0 %v1032
      %1090 = vmatpush.bf16.msra.mxu0 %v1031
      %1091 = vmatpush.bf16.msra.mxu0 %v1030
      %1092 = vmatpush.bf16.msra.mxu0 %v1029
      %1093 = vmatpush.bf16.msra.mxu0 %v1028
      %1094 = vmatmul.bf16.gmra.mxu0 %v863
      %v1095 = vpop.f32.mrf.mxu0
      %v1096 = vadd.f32 %v1083, %v1095
      %v1097 = vpop.f32.mrf.mxu0
      %1098 = vdwg.mxu0
      %v1099 = vmax.f32 %v1096, 0.0
      %v1100 = vld [vmem:[%s7] sm:$0xf]
      %v1101 = vmul.f32 %v1099, %v1100
      %vm1102 = vcmask 1043456
      %v1103 = vsel %vm1102, %v1101, 0.0
      %1104 = vadd.xlane.f32.xlu0 %v1103
      %v1105 = vpop.xlane.xlu0 %1104
      %v1106 = vrot.slane %v1105, 4
      %v1107 = vadd.f32 %v1105, %v1106
      %v1108 = vrot.slane %v1107, 2
      %v1109 = vadd.f32 %v1107, %v1108
      %v1110 = vrot.slane %v1109, 1
      %v1111 = vadd.f32 %v1109, %v1110
      %s1112 = vtos %v1111
      %v1113 = vstv %s1112
      %v1114 = vld [vmem:[#allocation6] sm:$0x1]
      %v1115 = vadd.f32 %v1113, %v1114
      %vm1116 = vcmask 0
      %1117 = vst.msk [vmem:[%s330] sm:$0x1] %vm1116, %v1115
      %p1118 = scmp.lt.s32.totalorder %s22, 1
      %s1119 = scalar_select %p1118, %s22, 1
      %s1120 = scalar_lea.vmem %s9, %s1119
      // Predicated region
      $region57: #{architecture_forward.1} parent=55 // pred_check
        %p1121 = pneg %p234
      $region58: #{architecture_forward.1} parent=55 // pred_check_branch
        %1123 = sbr.rel (%p1121) target = $region60
      $region59: #{architecture_forward.1} parent=55 // pred_region
        _
      $region60: #{architecture_forward.1} parent=55 // pred_fallthru
        _
    $region56: #{architecture_forward.1} parent=5 // pred_fallthru
      _
    %p1124 = scmp.le.s32.totalorder 2, %s17
    // Predicated region
    $region61: #{architecture_forward.1} parent=5 // pred_check
      %p1125 = pneg %p1124
    $region62: #{architecture_forward.1} parent=5 // pred_check_branch
      %1127 = sbr.rel (%p1125) target = $region64
    $region63: #{architecture_forward.1} parent=5 // pred_region
      %s1128 = ssub.s32 %s17, 2
      // Predicated region
      $region65: #{architecture_forward.1} parent=63 // pred_check
        %p1129 = pneg %p240
      $region66: #{architecture_forward.1} parent=63 // pred_check_branch
        %1131 = sbr.rel (%p1129) target = $region68
      $region67: #{architecture_forward.1} parent=63 // pred_region
        %p1132 = scmp.lt.s32.totalorder %s23, 1
        %s1133 = scalar_select %p1132, %s23, 1
        %s1134 = scalar_lea.vmem %s9, %s1133
      $region68: #{architecture_forward.1} parent=63 // pred_fallthru
        _
    $region64: #{architecture_forward.1} parent=5 // pred_fallthru
      _
  $region6: #{architecture_forward.1} parent=0 // loop_footer
    %s21 = sadd.s32 1, %s17
  $region7: #{architecture_forward.1} parent=0 // loop_footer_branch
    %16 = sbr.rel target = $region3
  $region8: #{architecture_forward.1} parent=0 // loop_exit
    _

</llo_original>
